<compile_context>
chip_gen: v7x
topology: tpu7x:2x2x1
jax: 0.10.0
libtpu: 0.0.40
codegen_flags: <defaults>
</compile_context>

<pallas_src>
import functools
import math

import jax
import jax.numpy as jnp
from jax.experimental import pallas as pl
from jax.experimental.pallas import tpu as pltpu


def _round_up(x: int, m: int) -> int:
    return ((x + m - 1) // m) * m


_CHUNK = 256          # inner-loop batch chunk (rows / sublanes per iteration)
_TARGET_TILE = 8192   # target BlockSpec batch tile (rows per grid step)


def qcritic_kernel(obs_ref, act_ref,
                   w1o_ref, w1a_ref, b1_ref,
                   w2_ref, b2_ref,
                   wo_ref, bo_ref,
                   out_ref, *, chunk, n_chunks):
    """Batch-on-sublanes MLP.

    obs_ref: (TILE_B, dim_obs), act_ref: (TILE_B, dim_action), out_ref: (TILE_B, 1).
    The big batch tile is walked in `chunk`-row pieces so the intermediate
    activations stay within ~16-48 vregs (no spill), while the DMA tile stays large.
    """
    # Tile-invariant weights / biases: load once, reuse across all chunks
    # (avoids re-issuing loads / broadcasts every loop iteration).
    w1o = w1o_ref[...]          # (dim_obs,    H1)
    w1a = w1a_ref[...]          # (dim_action, H1)
    b1 = b1_ref[...]            # (1, H1)  row bias, broadcasts over batch rows
    w2 = w2_ref[...]            # (H1, H2)
    b2 = b2_ref[...]            # (1, H2)
    wo = wo_ref[...]            # (1, H2)  output weight as a row for VPU epilogue
    bo = bo_ref[...]            # (1, 1)

    @pl.loop(0, n_chunks)
    def _(c):
        r = pl.multiple_of(c * chunk, chunk)
        xo = obs_ref[pl.ds(r, chunk), :]               # (chunk, dim_obs)
        xa = act_ref[pl.ds(r, chunk), :]               # (chunk, dim_action)

        # layer1: relu(obs @ W1o^T + act @ W1a^T + b1)   -> (chunk, H1)
        h = jnp.dot(xo, w1o, preferred_element_type=jnp.float32)
        h = h + jnp.dot(xa, w1a, preferred_element_type=jnp.float32)
        h = jnp.maximum(h + b1, 0.0)

        # layer2: relu(h @ W2^T + b2)                    -> (chunk, H2)
        h = jnp.dot(h, w2, preferred_element_type=jnp.float32)
        h = jnp.maximum(h + b2, 0.0)

        # output layer (out_features == 1): VPU multiply + lane (XLU) reduction
        # instead of a degenerate N=1 MXU matmul.                 -> (chunk, 1)
        q = jnp.sum(h * wo, axis=1, keepdims=True) + bo
        out_ref[pl.ds(r, chunk), :] = q


def qcritic_forward(obs, action, params, *, target_tile=_TARGET_TILE):
    """Pallas critic forward.  obs: [B, dim_obs], action: [B, dim_action] -> [B, 1]."""
    obs = jnp.asarray(obs, jnp.float32)
    action = jnp.asarray(action, jnp.float32)
    B, dim_obs = obs.shape
    dim_action = action.shape[1]
    h1 = params["w1_obs_t"].shape[1]
    h2 = params["w2_t"].shape[1]

    # --- batch tiling -------------------------------------------------------
    # Round the batch to the chunk granularity, choose the number of tiles from
    # the target tile size, then derive tile_b so padding stays minimal.
    unit = _CHUNK
    b_unit = _round_up(B, unit)
    num_tiles = max(1, -(-b_unit // target_tile))
    if num_tiles == 1 and b_unit >= 8 * unit:
        num_tiles = 2                      # let v7x's two TensorCores both work
    tile_b = _round_up(-(-b_unit // num_tiles), unit)
    b_pad = tile_b * num_tiles
    chunk = min(unit, tile_b)
    n_chunks = tile_b // chunk

    if b_pad != B:
        obs = jnp.pad(obs, ((0, b_pad - B), (0, 0)))
        action = jnp.pad(action, ((0, b_pad - B), (0, 0)))

    batch_map = lambda i: (i, 0)   # tile the batch (sublane) axis
    pinned = lambda i: (0, 0)      # weights / biases stay VMEM-resident

    in_specs = [
        pl.BlockSpec((tile_b, dim_obs), batch_map),      # obs (untransposed)
        pl.BlockSpec((tile_b, dim_action), batch_map),   # action (untransposed)
        pl.BlockSpec((dim_obs, h1), pinned),             # W1_obs^T
        pl.BlockSpec((dim_action, h1), pinned),          # W1_act^T
        pl.BlockSpec((1, h1), pinned),                   # b1 (row)
        pl.BlockSpec((h1, h2), pinned),                  # W2^T
        pl.BlockSpec((1, h2), pinned),                   # b2 (row)
        pl.BlockSpec((1, h2), pinned),                   # Wo (row)
        pl.BlockSpec((1, 1), pinned),                    # bo
    ]
    out_specs = pl.BlockSpec((tile_b, 1), batch_map)

    kernel = functools.partial(qcritic_kernel, chunk=chunk, n_chunks=n_chunks)

    out = pl.pallas_call(
        kernel,
        out_shape=jax.ShapeDtypeStruct((b_pad, 1), jnp.float32),
        grid=(num_tiles,),
        in_specs=in_specs,
        out_specs=out_specs,
        compiler_params=pltpu.CompilerParams(
            dimension_semantics=("parallel",),      # megacore split on v7x
            vmem_limit_bytes=32 * 1024 * 1024,      # ~24 MiB buffers at tile_b=8192
        ),
    )(obs, action,
      params["w1_obs_t"], params["w1_act_t"], params["b1"],
      params["w2_t"], params["b2"],
      params["wo"], params["bo"])

    return out[:B]


def xavier_uniform(key, shape):
    # shape is PyTorch layout (out_features, in_features)
    fan_out, fan_in = shape
    bound = math.sqrt(6.0 / (fan_in + fan_out))
    return jax.random.uniform(key, shape, jnp.float32, minval=-bound, maxval=bound)


def init_params(key, dim_obs, dim_action, dims_hidden=(64, 64)):
    d_in = dim_obs + dim_action
    h1, h2 = dims_hidden
    k1, k2, k3 = jax.random.split(key, 3)
    w1 = xavier_uniform(k1, (h1, d_in))   # layer1.weight, PyTorch (out, in)
    w2 = xavier_uniform(k2, (h2, h1))     # layer2.weight
    wo = xavier_uniform(k3, (1, h2))      # output.weight
    return {
        # Stored pre-transposed so the kernel does plain x @ W^T matmuls.
        "w1_obs_t": jnp.asarray(w1[:, :dim_obs].T),   # (dim_obs, h1)
        "w1_act_t": jnp.asarray(w1[:, dim_obs:].T),   # (dim_action, h1)
        "b1": jnp.zeros((1, h1), jnp.float32),        # row bias (broadcast over batch)
        "w2_t": jnp.asarray(w2.T),                    # (h1, h2)
        "b2": jnp.zeros((1, h2), jnp.float32),
        "wo": jnp.asarray(wo),                        # (1, h2) row for VPU epilogue
        "bo": jnp.zeros((1, 1), jnp.float32),
    }


def qcritic_ref(obs, action, p):
    # pure-JAX reference (same math as the PyTorch module)
    x = jnp.concatenate([obs, action], axis=1)
    w1_t = jnp.concatenate([p["w1_obs_t"], p["w1_act_t"]], axis=0)   # (d_in, h1)
    x = jnp.maximum(x @ w1_t + p["b1"], 0.0)
    x = jnp.maximum(x @ p["w2_t"] + p["b2"], 0.0)
    return x @ p["wo"].T + p["bo"]                                    # (B, 1)


if __name__ == "__main__":
    key = jax.random.PRNGKey(0)
    kp, ko, ka = jax.random.split(key, 3)

    batch = 8
    dim_obs = 12
    dim_action = 4

    params = init_params(kp, dim_obs, dim_action, dims_hidden=(64, 64))
    obs = jax.random.normal(ko, (batch, dim_obs), dtype=jnp.float32)
    action = jax.random.normal(ka, (batch, dim_action), dtype=jnp.float32)

    out = qcritic_forward(obs, action, params)
    out = jax.block_until_ready(out)

    ref = qcritic_ref(obs, action, params)
    assert out.shape == (batch, 1), out.shape
    assert jnp.allclose(out, ref, atol=1e-4, rtol=1e-4), (out, ref)

    print("KERNEL_OK")
</pallas_src>

<mosaic_0001>
module attributes {stable_mosaic.version = 11 : i64} {
  func.func @qcritic_kernel(%arg0: i32, %arg1: memref<256x12xf32, #tpu.memory_space<vmem>>, %arg2: memref<256x4xf32, #tpu.memory_space<vmem>>, %arg3: memref<12x64xf32, #tpu.memory_space<vmem>>, %arg4: memref<4x64xf32, #tpu.memory_space<vmem>>, %arg5: memref<1x64xf32, #tpu.memory_space<vmem>>, %arg6: memref<64x64xf32, #tpu.memory_space<vmem>>, %arg7: memref<1x64xf32, #tpu.memory_space<vmem>>, %arg8: memref<1x64xf32, #tpu.memory_space<vmem>>, %arg9: memref<1x1xf32, #tpu.memory_space<vmem>>, %arg10: memref<256x1xf32, #tpu.memory_space<vmem>>) attributes {dimension_semantics = [#tpu.dimension_semantics<parallel>], iteration_bounds = array<i64: 1>, scalar_prefetch = 0 : i64, scratch_operands = 0 : i64, tpu.core_type = #tpu.core_type<tc>, window_params = [{transform_indices = @transform_0, window_bounds = array<i64: 256, 12>}, {transform_indices = @transform_1, window_bounds = array<i64: 256, 4>}, {pipeline_mode = #tpu.pipeline_mode<synchronous>, transform_indices = @transform_2, window_bounds = array<i64: 12, 64>}, {pipeline_mode = #tpu.pipeline_mode<synchronous>, transform_indices = @transform_3, window_bounds = array<i64: 4, 64>}, {pipeline_mode = #tpu.pipeline_mode<synchronous>, transform_indices = @transform_4, window_bounds = array<i64: 1, 64>}, {pipeline_mode = #tpu.pipeline_mode<synchronous>, transform_indices = @transform_5, window_bounds = array<i64: 64, 64>}, {pipeline_mode = #tpu.pipeline_mode<synchronous>, transform_indices = @transform_6, window_bounds = array<i64: 1, 64>}, {pipeline_mode = #tpu.pipeline_mode<synchronous>, transform_indices = @transform_7, window_bounds = array<i64: 1, 64>}, {pipeline_mode = #tpu.pipeline_mode<synchronous>, transform_indices = @transform_8, window_bounds = array<i64: 1, 1>}, {transform_indices = @transform_9, window_bounds = array<i64: 256, 1>}]} {
    %c0 = arith.constant 0 : index
    %c0_0 = arith.constant 0 : index
    %0 = vector.load %arg3[%c0, %c0_0] : memref<12x64xf32, #tpu.memory_space<vmem>>, vector<12x64xf32>
    %c0_1 = arith.constant 0 : index
    %c0_2 = arith.constant 0 : index
    %1 = vector.load %arg4[%c0_1, %c0_2] : memref<4x64xf32, #tpu.memory_space<vmem>>, vector<4x64xf32>
    %c0_3 = arith.constant 0 : index
    %c0_4 = arith.constant 0 : index
    %2 = vector.load %arg5[%c0_3, %c0_4] : memref<1x64xf32, #tpu.memory_space<vmem>>, vector<1x64xf32>
    %c0_5 = arith.constant 0 : index
    %c0_6 = arith.constant 0 : index
    %3 = vector.load %arg6[%c0_5, %c0_6] : memref<64x64xf32, #tpu.memory_space<vmem>>, vector<64x64xf32>
    %c0_7 = arith.constant 0 : index
    %c0_8 = arith.constant 0 : index
    %4 = vector.load %arg7[%c0_7, %c0_8] : memref<1x64xf32, #tpu.memory_space<vmem>>, vector<1x64xf32>
    %c0_9 = arith.constant 0 : index
    %c0_10 = arith.constant 0 : index
    %5 = vector.load %arg8[%c0_9, %c0_10] : memref<1x64xf32, #tpu.memory_space<vmem>>, vector<1x64xf32>
    %c0_11 = arith.constant 0 : index
    %c0_12 = arith.constant 0 : index
    %6 = vector.load %arg9[%c0_11, %c0_12] : memref<1x1xf32, #tpu.memory_space<vmem>>, vector<1x1xf32>
    %c0_i32 = arith.constant 0 : i32
    %c1_i32 = arith.constant 1 : i32
    %7 = arith.muli %c0_i32, %c1_i32 : i32
    %c0_i32_13 = arith.constant 0 : i32
    %8 = arith.addi %c0_i32_13, %7 : i32
    %c256_i32 = arith.constant 256 : i32
    %9 = arith.muli %8, %c256_i32 : i32
    %10 = tpu.assume_multiple %9, 256 : i32
    %11 = arith.index_cast %10 : i32 to index
    %c0_14 = arith.constant 0 : index
    %12 = vector.load %arg1[%11, %c0_14] : memref<256x12xf32, #tpu.memory_space<vmem>>, vector<256x12xf32>
    %13 = arith.index_cast %10 : i32 to index
    %c0_15 = arith.constant 0 : index
    %14 = vector.load %arg2[%13, %c0_15] : memref<256x4xf32, #tpu.memory_space<vmem>>, vector<256x4xf32>
    %cst = arith.constant dense<0.000000e+00> : vector<256x64xf32>
    %15 = tpu.matmul %12, %0, %cst {dimension_numbers = #tpu.dot_dimension_numbers<[1], [0], [0], [1], [0, 0, 1, 1], [], []>} : vector<256x12xf32>, vector<12x64xf32>, vector<256x64xf32> -> vector<256x64xf32>
    %cst_16 = arith.constant dense<0.000000e+00> : vector<256x64xf32>
    %16 = tpu.matmul %14, %1, %cst_16 {dimension_numbers = #tpu.dot_dimension_numbers<[1], [0], [0], [1], [0, 0, 1, 1], [], []>} : vector<256x4xf32>, vector<4x64xf32>, vector<256x64xf32> -> vector<256x64xf32>
    %17 = arith.addf %15, %16 : vector<256x64xf32>
    %18 = vector.broadcast %2 : vector<1x64xf32> to vector<256x64xf32>
    %19 = arith.addf %17, %18 : vector<256x64xf32>
    %cst_17 = arith.constant 0.000000e+00 : f32
    %20 = vector.broadcast %cst_17 : f32 to vector<256x64xf32>
    %21 = arith.maximumf %19, %20 : vector<256x64xf32>
    %cst_18 = arith.constant dense<0.000000e+00> : vector<256x64xf32>
    %22 = tpu.matmul %21, %3, %cst_18 {dimension_numbers = #tpu.dot_dimension_numbers<[1], [0], [0], [1], [0, 0, 1, 1], [], []>} : vector<256x64xf32>, vector<64x64xf32>, vector<256x64xf32> -> vector<256x64xf32>
    %23 = vector.broadcast %4 : vector<1x64xf32> to vector<256x64xf32>
    %24 = arith.addf %22, %23 : vector<256x64xf32>
    %cst_19 = arith.constant 0.000000e+00 : f32
    %25 = vector.broadcast %cst_19 : f32 to vector<256x64xf32>
    %26 = arith.maximumf %24, %25 : vector<256x64xf32>
    %27 = vector.broadcast %5 : vector<1x64xf32> to vector<256x64xf32>
    %28 = arith.mulf %26, %27 : vector<256x64xf32>
    %cst_20 = arith.constant dense<0.000000e+00> : vector<256xf32>
    %29 = vector.multi_reduction <add>, %28, %cst_20 [1] : vector<256x64xf32> to vector<256xf32>
    %30 = vector.shape_cast %29 : vector<256xf32> to vector<256x1xf32>
    %31 = vector.broadcast %6 : vector<1x1xf32> to vector<256x1xf32>
    %32 = arith.addf %30, %31 : vector<256x1xf32>
    %33 = arith.index_cast %10 : i32 to index
    %c0_21 = arith.constant 0 : index
    %34 = vector.load %arg10[%33, %c0_21] : memref<256x1xf32, #tpu.memory_space<vmem>>, vector<256x1xf32>
    tpu.vector_store %arg10[%33, %c0_21], %32 {strides = array<i32>} : memref<256x1xf32, #tpu.memory_space<vmem>>, vector<256x1xf32>,
    %c1_i32_22 = arith.constant 1 : i32
    return
  }
  func.func @transform_0(%arg0: i32) -> (i32, i32) {
    %c0_i32 = arith.constant 0 : i32
    %c0_i32_0 = arith.constant 0 : i32
    return %arg0, %c0_i32 : i32, i32
  }
  func.func @transform_1(%arg0: i32) -> (i32, i32) {
    %c0_i32 = arith.constant 0 : i32
    %c0_i32_0 = arith.constant 0 : i32
    return %arg0, %c0_i32 : i32, i32
  }
  func.func @transform_2(%arg0: i32) -> (i32, i32) {
    %c0_i32 = arith.constant 0 : i32
    %c0_i32_0 = arith.constant 0 : i32
    %c0_i32_1 = arith.constant 0 : i32
    return %c0_i32, %c0_i32_0 : i32, i32
  }
  func.func @transform_3(%arg0: i32) -> (i32, i32) {
    %c0_i32 = arith.constant 0 : i32
    %c0_i32_0 = arith.constant 0 : i32
    %c0_i32_1 = arith.constant 0 : i32
    return %c0_i32, %c0_i32_0 : i32, i32
  }
  func.func @transform_4(%arg0: i32) -> (i32, i32) {
    %c0_i32 = arith.constant 0 : i32
    %c0_i32_0 = arith.constant 0 : i32
    %c0_i32_1 = arith.constant 0 : i32
    return %c0_i32, %c0_i32_0 : i32, i32
  }
  func.func @transform_5(%arg0: i32) -> (i32, i32) {
    %c0_i32 = arith.constant 0 : i32
    %c0_i32_0 = arith.constant 0 : i32
    %c0_i32_1 = arith.constant 0 : i32
    return %c0_i32, %c0_i32_0 : i32, i32
  }
  func.func @transform_6(%arg0: i32) -> (i32, i32) {
    %c0_i32 = arith.constant 0 : i32
    %c0_i32_0 = arith.constant 0 : i32
    %c0_i32_1 = arith.constant 0 : i32
    return %c0_i32, %c0_i32_0 : i32, i32
  }
  func.func @transform_7(%arg0: i32) -> (i32, i32) {
    %c0_i32 = arith.constant 0 : i32
    %c0_i32_0 = arith.constant 0 : i32
    %c0_i32_1 = arith.constant 0 : i32
    return %c0_i32, %c0_i32_0 : i32, i32
  }
  func.func @transform_8(%arg0: i32) -> (i32, i32) {
    %c0_i32 = arith.constant 0 : i32
    %c0_i32_0 = arith.constant 0 : i32
    %c0_i32_1 = arith.constant 0 : i32
    return %c0_i32, %c0_i32_0 : i32, i32
  }
  func.func @transform_9(%arg0: i32) -> (i32, i32) {
    %c0_i32 = arith.constant 0 : i32
    %c0_i32_0 = arith.constant 0 : i32
    return %arg0, %c0_i32 : i32, i32
  }
}

</mosaic_0001>

<llo_original>
// kernel: tpu_custom_call.1
$region0: #{tpu_custom_call.1}
  #allocation0 [shape = 'u32[]', space=smem, size = 0x4, offset = 0x4, fixed_abs, tag = 'smem constant byte address 0x4 - core index']
  #allocation1 [shape = 'u32[144,128]{1,0:T(1,128)}', space=vmem, size = 0x12000, scoped, tag = 'internal scratch']
  #allocation2 [shape = 'f32[1,1]{1,0:T(1,128)S(1)}', space=vmem, size = 0x200, scoped, tag = 'scoped memory for tpu_custom_call.1']
  %s0 = inlined_call_operand.vmem [shape: f32[256,12], index: 0, kind: input, shape index: {}]
  %s1 = inlined_call_operand.vmem [shape: f32[256,4], index: 1, kind: input, shape index: {}]
  %s2 = inlined_call_operand.vmem [shape: f32[12,64], index: 2, kind: input, shape index: {}]
  %s3 = inlined_call_operand.vmem [shape: f32[4,64], index: 3, kind: input, shape index: {}]
  %s4 = inlined_call_operand.vmem [shape: f32[1,64], index: 4, kind: input, shape index: {}]
  %s5 = inlined_call_operand.vmem [shape: f32[64,64], index: 5, kind: input, shape index: {}]
  %s6 = inlined_call_operand.vmem [shape: f32[1,64], index: 6, kind: input, shape index: {}]
  %s7 = inlined_call_operand.vmem [shape: f32[1,64], index: 7, kind: input, shape index: {}]
  %s8 = inlined_call_operand.<no memory space> [shape: f32[1,1], index: 8, kind: input, shape index: {}]
  %s9 = inlined_call_operand.vmem [shape: f32[256,1], index: 9, kind: output, shape index: {}]
  %s10 = sld [smem:[#allocation0]]
  $region46: #{tpu_custom_call.1} parent=0
    _
  %s12 = ssub.s32 1, %s10
  %s13 = scalar_select 0, %s12, %s10
  %v14 = vstv %s8
  %15 = vst [vmem:[#allocation2] sm:$0x1] %v14
  // Predicated region
  $region2: #{tpu_custom_call.1} parent=0 // pred_check
    _
  $region3: #{tpu_custom_call.1} parent=0 // pred_check_branch
    %17 = sbr.rel (0) target = $region5
  $region4: #{tpu_custom_call.1} parent=0 // pred_region
    _
  $region5: #{tpu_custom_call.1} parent=0 // pred_fallthru
    _
  // Predicated region
  $region6: #{tpu_custom_call.1} parent=0 // pred_check
    _
  $region7: #{tpu_custom_call.1} parent=0 // pred_check_branch
    %19 = sbr.rel (0) target = $region9
  $region8: #{tpu_custom_call.1} parent=0 // pred_region
    _
  $region9: #{tpu_custom_call.1} parent=0 // pred_fallthru
    _
  // Predicated region
  $region10: #{tpu_custom_call.1} parent=0 // pred_check
    _
  $region11: #{tpu_custom_call.1} parent=0 // pred_check_branch
    %21 = sbr.rel (0) target = $region13
  $region12: #{tpu_custom_call.1} parent=0 // pred_region
    _
  $region13: #{tpu_custom_call.1} parent=0 // pred_fallthru
    _
  // Predicated region
  $region14: #{tpu_custom_call.1} parent=0 // pred_check
    _
  $region15: #{tpu_custom_call.1} parent=0 // pred_check_branch
    %23 = sbr.rel (0) target = $region17
  $region16: #{tpu_custom_call.1} parent=0 // pred_region
    _
  $region17: #{tpu_custom_call.1} parent=0 // pred_fallthru
    _
  // Predicated region
  $region18: #{tpu_custom_call.1} parent=0 // pred_check
    _
  $region19: #{tpu_custom_call.1} parent=0 // pred_check_branch
    %25 = sbr.rel (0) target = $region21
  $region20: #{tpu_custom_call.1} parent=0 // pred_region
    _
  $region21: #{tpu_custom_call.1} parent=0 // pred_fallthru
    _
  // Predicated region
  $region22: #{tpu_custom_call.1} parent=0 // pred_check
    _
  $region23: #{tpu_custom_call.1} parent=0 // pred_check_branch
    %27 = sbr.rel (0) target = $region25
  $region24: #{tpu_custom_call.1} parent=0 // pred_region
    _
  $region25: #{tpu_custom_call.1} parent=0 // pred_fallthru
    _
  // Predicated region
  $region26: #{tpu_custom_call.1} parent=0 // pred_check
    _
  $region27: #{tpu_custom_call.1} parent=0 // pred_check_branch
    %29 = sbr.rel (0) target = $region29
  $region28: #{tpu_custom_call.1} parent=0 // pred_region
    _
  $region29: #{tpu_custom_call.1} parent=0 // pred_fallthru
    _
  // Predicated region
  $region30: #{tpu_custom_call.1} parent=0 // pred_check
    _
  $region31: #{tpu_custom_call.1} parent=0 // pred_check_branch
    %31 = sbr.rel (0) target = $region33
  $region32: #{tpu_custom_call.1} parent=0 // pred_region
    _
  $region33: #{tpu_custom_call.1} parent=0 // pred_fallthru
    _
  // Predicated region
  $region34: #{tpu_custom_call.1} parent=0 // pred_check
    _
  $region35: #{tpu_custom_call.1} parent=0 // pred_check_branch
    %33 = sbr.rel (0) target = $region37
  $region36: #{tpu_custom_call.1} parent=0 // pred_region
    _
  $region37: #{tpu_custom_call.1} parent=0 // pred_fallthru
    _
  %v34 = vld [vmem:[%s2] sm:$0xff]
  %v35 = vld [vmem:[%s2 + $0x8] sm:$0xf]
  %v36 = vld [vmem:[%s3] sm:$0xf]
  %v37 = vld [vmem:[%s4] sm:$0x1]
  %v38 = vld [vmem:[%s5] sm:$0xff]
  %v39 = vld [vmem:[%s5 + $0x8] sm:$0xff]
  %v40 = vld [vmem:[%s5 + $0x10] sm:$0xff]
  %v41 = vld [vmem:[%s5 + $0x18] sm:$0xff]
  %v42 = vld [vmem:[%s5 + $0x20] sm:$0xff]
  %v43 = vld [vmem:[%s5 + $0x28] sm:$0xff]
  %v44 = vld [vmem:[%s5 + $0x30] sm:$0xff]
  %v45 = vld [vmem:[%s5 + $0x38] sm:$0xff]
  %v46 = vld [vmem:[%s6] sm:$0x1]
  %v47 = vld [vmem:[%s7] sm:$0x1]
  %v48 = vld [vmem:[#allocation2] sm:$0x1]
  %v49 = vld [vmem:[%s0] sm:$0xff]
  %v50 = vld [vmem:[%s0 + $0x8] sm:$0xff]
  %v51 = vld [vmem:[%s0 + $0x10] sm:$0xff]
  %v52 = vld [vmem:[%s0 + $0x18] sm:$0xff]
  %v53 = vld [vmem:[%s0 + $0x20] sm:$0xff]
  %v54 = vld [vmem:[%s0 + $0x28] sm:$0xff]
  %v55 = vld [vmem:[%s0 + $0x30] sm:$0xff]
  %v56 = vld [vmem:[%s0 + $0x38] sm:$0xff]
  %v57 = vld [vmem:[%s0 + $0x40] sm:$0xff]
  %v58 = vld [vmem:[%s0 + $0x48] sm:$0xff]
  %v59 = vld [vmem:[%s0 + $0x50] sm:$0xff]
  %v60 = vld [vmem:[%s0 + $0x58] sm:$0xff]
  %v61 = vld [vmem:[%s0 + $0x60] sm:$0xff]
  %v62 = vld [vmem:[%s0 + $0x68] sm:$0xff]
  %v63 = vld [vmem:[%s0 + $0x70] sm:$0xff]
  %v64 = vld [vmem:[%s0 + $0x78] sm:$0xff]
  %v65 = vld [vmem:[%s0 + $0x80] sm:$0xff]
  %v66 = vld [vmem:[%s0 + $0x88] sm:$0xff]
  %v67 = vld [vmem:[%s0 + $0x90] sm:$0xff]
  %v68 = vld [vmem:[%s0 + $0x98] sm:$0xff]
  %v69 = vld [vmem:[%s0 + $0xa0] sm:$0xff]
  %v70 = vld [vmem:[%s0 + $0xa8] sm:$0xff]
  %v71 = vld [vmem:[%s0 + $0xb0] sm:$0xff]
  %v72 = vld [vmem:[%s0 + $0xb8] sm:$0xff]
  %v73 = vld [vmem:[%s0 + $0xc0] sm:$0xff]
  %v74 = vld [vmem:[%s0 + $0xc8] sm:$0xff]
  %v75 = vld [vmem:[%s0 + $0xd0] sm:$0xff]
  %v76 = vld [vmem:[%s0 + $0xd8] sm:$0xff]
  %v77 = vld [vmem:[%s0 + $0xe0] sm:$0xff]
  %v78 = vld [vmem:[%s0 + $0xe8] sm:$0xff]
  %v79 = vld [vmem:[%s0 + $0xf0] sm:$0xff]
  %v80 = vld [vmem:[%s0 + $0xf8] sm:$0xff]
  %v81 = vld [vmem:[%s1] sm:$0xff]
  %v82 = vld [vmem:[%s1 + $0x8] sm:$0xff]
  %v83 = vld [vmem:[%s1 + $0x10] sm:$0xff]
  %v84 = vld [vmem:[%s1 + $0x18] sm:$0xff]
  %v85 = vld [vmem:[%s1 + $0x20] sm:$0xff]
  %v86 = vld [vmem:[%s1 + $0x28] sm:$0xff]
  %v87 = vld [vmem:[%s1 + $0x30] sm:$0xff]
  %v88 = vld [vmem:[%s1 + $0x38] sm:$0xff]
  %v89 = vld [vmem:[%s1 + $0x40] sm:$0xff]
  %v90 = vld [vmem:[%s1 + $0x48] sm:$0xff]
  %v91 = vld [vmem:[%s1 + $0x50] sm:$0xff]
  %v92 = vld [vmem:[%s1 + $0x58] sm:$0xff]
  %v93 = vld [vmem:[%s1 + $0x60] sm:$0xff]
  %v94 = vld [vmem:[%s1 + $0x68] sm:$0xff]
  %v95 = vld [vmem:[%s1 + $0x70] sm:$0xff]
  %v96 = vld [vmem:[%s1 + $0x78] sm:$0xff]
  %v97 = vld [vmem:[%s1 + $0x80] sm:$0xff]
  %v98 = vld [vmem:[%s1 + $0x88] sm:$0xff]
  %v99 = vld [vmem:[%s1 + $0x90] sm:$0xff]
  %v100 = vld [vmem:[%s1 + $0x98] sm:$0xff]
  %v101 = vld [vmem:[%s1 + $0xa0] sm:$0xff]
  %v102 = vld [vmem:[%s1 + $0xa8] sm:$0xff]
  %v103 = vld [vmem:[%s1 + $0xb0] sm:$0xff]
  %v104 = vld [vmem:[%s1 + $0xb8] sm:$0xff]
  %v105 = vld [vmem:[%s1 + $0xc0] sm:$0xff]
  %v106 = vld [vmem:[%s1 + $0xc8] sm:$0xff]
  %v107 = vld [vmem:[%s1 + $0xd0] sm:$0xff]
  %v108 = vld [vmem:[%s1 + $0xd8] sm:$0xff]
  %v109 = vld [vmem:[%s1 + $0xe0] sm:$0xff]
  %v110 = vld [vmem:[%s1 + $0xe8] sm:$0xff]
  %v111 = vld [vmem:[%s1 + $0xf0] sm:$0xff]
  %v112 = vld [vmem:[%s1 + $0xf8] sm:$0xff]
  %vm113 = vcmask 31744
  %v115 = vsel %vm113, %v81, 0
  %v118 = vsel %vm113, %v82, 0
  %v121 = vsel %vm113, %v83, 0
  %v124 = vsel %vm113, %v84, 0
  %v127 = vsel %vm113, %v85, 0
  %v130 = vsel %vm113, %v86, 0
  %v133 = vsel %vm113, %v87, 0
  %v136 = vsel %vm113, %v88, 0
  %v139 = vsel %vm113, %v89, 0
  %v142 = vsel %vm113, %v90, 0
  %v145 = vsel %vm113, %v91, 0
  %v148 = vsel %vm113, %v92, 0
  %v151 = vsel %vm113, %v93, 0
  %v154 = vsel %vm113, %v94, 0
  %v157 = vsel %vm113, %v95, 0
  %v160 = vsel %vm113, %v96, 0
  %v163 = vsel %vm113, %v97, 0
  %v166 = vsel %vm113, %v98, 0
  %v169 = vsel %vm113, %v99, 0
  %v172 = vsel %vm113, %v100, 0
  %v175 = vsel %vm113, %v101, 0
  %v178 = vsel %vm113, %v102, 0
  %v181 = vsel %vm113, %v103, 0
  %v184 = vsel %vm113, %v104, 0
  %v187 = vsel %vm113, %v105, 0
  %v190 = vsel %vm113, %v106, 0
  %v193 = vsel %vm113, %v107, 0
  %v196 = vsel %vm113, %v108, 0
  %v199 = vsel %vm113, %v109, 0
  %v202 = vsel %vm113, %v110, 0
  %v205 = vsel %vm113, %v111, 0
  %v208 = vsel %vm113, %v112, 0
  %vm210 = vcmask 1043456
  %v212 = vsel %vm210, %v36, 0
  %214 = vmatprep.subr.mxu0 0.0
  %215 = vmatpush1.msra.mxu0 %v212
  %216 = vmatprep.subr.mxu0 0.0
  %217 = vmatpush1.msra.mxu0 0.0
  %218 = vmatprep.subr.mxu0 0.0
  %219 = vmatpush1.msra.mxu0 0.0
  %220 = vmatprep.subr.mxu0 0.0
  %221 = vmatpush1.msra.mxu0 0.0
  %222 = vmatprep.subr.mxu0 0.0
  %223 = vmatpush1.msra.mxu0 0.0
  %224 = vmatprep.subr.mxu0 0.0
  %225 = vmatpush1.msra.mxu0 0.0
  %226 = vmatprep.subr.mxu0 0.0
  %227 = vmatpush1.msra.mxu0 0.0
  %228 = vmatprep.subr.mxu0 0.0
  %229 = vmatpush1.msra.mxu0 0.0
  %230 = vmatprep.subr.mxu0 0.0
  %231 = vmatpush1.msra.mxu0 0.0
  %232 = vmatprep.subr.mxu0 0.0
  %233 = vmatpush1.msra.mxu0 0.0
  %234 = vmatprep.subr.mxu0 0.0
  %235 = vmatpush1.msra.mxu0 0.0
  %236 = vmatprep.subr.mxu0 0.0
  %237 = vmatpush1.msra.mxu0 0.0
  %238 = vmatprep.subr.mxu0 0.0
  %239 = vmatpush1.msra.mxu0 0.0
  %240 = vmatprep.subr.mxu0 0.0
  %241 = vmatpush1.msra.mxu0 0.0
  %242 = vmatprep.subr.mxu0 0.0
  %243 = vmatpush1.msra.mxu0 0.0
  %244 = vmatprep.subr.mxu0 0.0
  %245 = vmatpush1.msra.mxu0 0.0
  %246 = vmatprep.subr.mxu0 0.0
  %247 = vmatpush1.msra.mxu0 0.0
  %248 = vmatprep.subr.mxu0 0.0
  %249 = vmatpush1.msra.mxu0 0.0
  %250 = vmatprep.subr.mxu0 0.0
  %251 = vmatpush1.msra.mxu0 0.0
  %252 = vmatprep.subr.mxu0 0.0
  %253 = vmatpush1.msra.mxu0 0.0
  %254 = vmatprep.subr.mxu0 0.0
  %255 = vmatpush1.msra.mxu0 0.0
  %256 = vmatprep.subr.mxu0 0.0
  %257 = vmatpush1.msra.mxu0 0.0
  %258 = vmatprep.subr.mxu0 0.0
  %259 = vmatpush1.msra.mxu0 0.0
  %260 = vmatprep.subr.mxu0 0.0
  %261 = vmatpush1.msra.mxu0 0.0
  %262 = vmatprep.subr.mxu0 0.0
  %263 = vmatpush1.msra.mxu0 0.0
  %264 = vmatprep.subr.mxu0 0.0
  %265 = vmatpush1.msra.mxu0 0.0
  %266 = vmatprep.subr.mxu0 0.0
  %267 = vmatpush1.msra.mxu0 0.0
  %268 = vmatprep.subr.mxu0 0.0
  %269 = vmatpush1.msra.mxu0 0.0
  %270 = vmatprep.subr.mxu0 0.0
  %271 = vmatpush1.msra.mxu0 0.0
  %272 = vmatprep.subr.mxu0 0.0
  %273 = vmatpush1.msra.mxu0 0.0
  %274 = vmatprep.subr.mxu0 0.0
  %275 = vmatpush1.msra.mxu0 0.0
  %276 = vmatprep.subr.mxu0 0.0
  %277 = vmatpush1.msra.mxu0 0.0
  %278 = vmatprep.mubr.f32.mxu0 0.0
  %279 = vmatmul.mubr.f32.gmra.mrb[0].mxu0 %v115
  %v280 = vpop.f32.mrb[0].mxu0
  %v281 = vadd.f32 0.0, %v280
  %v282 = vpop.f32.mrb[0].mxu0
  %283 = vmatprep.mubr.f32.mxu0 0.0
  %284 = vmatmul.mubr.f32.gmra.mrb[0].mxu0 %v118
  %v285 = vpop.f32.mrb[0].mxu0
  %v286 = vadd.f32 0.0, %v285
  %v287 = vpop.f32.mrb[0].mxu0
  %288 = vmatprep.mubr.f32.mxu0 0.0
  %289 = vmatmul.mubr.f32.gmra.mrb[0].mxu0 %v121
  %v290 = vpop.f32.mrb[0].mxu0
  %v291 = vadd.f32 0.0, %v290
  %v292 = vpop.f32.mrb[0].mxu0
  %293 = vmatprep.mubr.f32.mxu0 0.0
  %294 = vmatmul.mubr.f32.gmra.mrb[0].mxu0 %v124
  %v295 = vpop.f32.mrb[0].mxu0
  %v296 = vadd.f32 0.0, %v295
  %v297 = vpop.f32.mrb[0].mxu0
  %298 = vmatprep.mubr.f32.mxu0 0.0
  %299 = vmatmul.mubr.f32.gmra.mrb[0].mxu0 %v127
  %v300 = vpop.f32.mrb[0].mxu0
  %v301 = vadd.f32 0.0, %v300
  %v302 = vpop.f32.mrb[0].mxu0
  %303 = vmatprep.mubr.f32.mxu0 0.0
  %304 = vmatmul.mubr.f32.gmra.mrb[0].mxu0 %v130
  %v305 = vpop.f32.mrb[0].mxu0
  %v306 = vadd.f32 0.0, %v305
  %v307 = vpop.f32.mrb[0].mxu0
  %308 = vmatprep.mubr.f32.mxu0 0.0
  %309 = vmatmul.mubr.f32.gmra.mrb[0].mxu0 %v133
  %v310 = vpop.f32.mrb[0].mxu0
  %v311 = vadd.f32 0.0, %v310
  %v312 = vpop.f32.mrb[0].mxu0
  %313 = vmatprep.mubr.f32.mxu0 0.0
  %314 = vmatmul.mubr.f32.gmra.mrb[0].mxu0 %v136
  %v315 = vpop.f32.mrb[0].mxu0
  %v316 = vadd.f32 0.0, %v315
  %v317 = vpop.f32.mrb[0].mxu0
  %318 = vmatprep.mubr.f32.mxu0 0.0
  %319 = vmatmul.mubr.f32.gmra.mrb[0].mxu0 %v139
  %v320 = vpop.f32.mrb[0].mxu0
  %v321 = vadd.f32 0.0, %v320
  %v322 = vpop.f32.mrb[0].mxu0
  %323 = vmatprep.mubr.f32.mxu0 0.0
  %324 = vmatmul.mubr.f32.gmra.mrb[0].mxu0 %v142
  %v325 = vpop.f32.mrb[0].mxu0
  %v326 = vadd.f32 0.0, %v325
  %v327 = vpop.f32.mrb[0].mxu0
  %328 = vmatprep.mubr.f32.mxu0 0.0
  %329 = vmatmul.mubr.f32.gmra.mrb[0].mxu0 %v145
  %v330 = vpop.f32.mrb[0].mxu0
  %v331 = vadd.f32 0.0, %v330
  %v332 = vpop.f32.mrb[0].mxu0
  %333 = vmatprep.mubr.f32.mxu0 0.0
  %334 = vmatmul.mubr.f32.gmra.mrb[0].mxu0 %v148
  %v335 = vpop.f32.mrb[0].mxu0
  %v336 = vadd.f32 0.0, %v335
  %v337 = vpop.f32.mrb[0].mxu0
  %338 = vmatprep.mubr.f32.mxu0 0.0
  %339 = vmatmul.mubr.f32.gmra.mrb[0].mxu0 %v151
  %v340 = vpop.f32.mrb[0].mxu0
  %v341 = vadd.f32 0.0, %v340
  %v342 = vpop.f32.mrb[0].mxu0
  %343 = vmatprep.mubr.f32.mxu0 0.0
  %344 = vmatmul.mubr.f32.gmra.mrb[0].mxu0 %v154
  %v345 = vpop.f32.mrb[0].mxu0
  %v346 = vadd.f32 0.0, %v345
  %v347 = vpop.f32.mrb[0].mxu0
  %348 = vmatprep.mubr.f32.mxu0 0.0
  %349 = vmatmul.mubr.f32.gmra.mrb[0].mxu0 %v157
  %v350 = vpop.f32.mrb[0].mxu0
  %v351 = vadd.f32 0.0, %v350
  %v352 = vpop.f32.mrb[0].mxu0
  %353 = vmatprep.mubr.f32.mxu0 0.0
  %354 = vmatmul.mubr.f32.gmra.mrb[0].mxu0 %v160
  %v355 = vpop.f32.mrb[0].mxu0
  %v356 = vadd.f32 0.0, %v355
  %v357 = vpop.f32.mrb[0].mxu0
  %358 = vmatprep.mubr.f32.mxu0 0.0
  %359 = vmatmul.mubr.f32.gmra.mrb[0].mxu0 %v163
  %v360 = vpop.f32.mrb[0].mxu0
  %v361 = vadd.f32 0.0, %v360
  %v362 = vpop.f32.mrb[0].mxu0
  %363 = vmatprep.mubr.f32.mxu0 0.0
  %364 = vmatmul.mubr.f32.gmra.mrb[0].mxu0 %v166
  %v365 = vpop.f32.mrb[0].mxu0
  %v366 = vadd.f32 0.0, %v365
  %v367 = vpop.f32.mrb[0].mxu0
  %368 = vmatprep.mubr.f32.mxu0 0.0
  %369 = vmatmul.mubr.f32.gmra.mrb[0].mxu0 %v169
  %v370 = vpop.f32.mrb[0].mxu0
  %v371 = vadd.f32 0.0, %v370
  %v372 = vpop.f32.mrb[0].mxu0
  %373 = vmatprep.mubr.f32.mxu0 0.0
  %374 = vmatmul.mubr.f32.gmra.mrb[0].mxu0 %v172
  %v375 = vpop.f32.mrb[0].mxu0
  %v376 = vadd.f32 0.0, %v375
  %v377 = vpop.f32.mrb[0].mxu0
  %378 = vmatprep.mubr.f32.mxu0 0.0
  %379 = vmatmul.mubr.f32.gmra.mrb[0].mxu0 %v175
  %v380 = vpop.f32.mrb[0].mxu0
  %v381 = vadd.f32 0.0, %v380
  %v382 = vpop.f32.mrb[0].mxu0
  %383 = vmatprep.mubr.f32.mxu0 0.0
  %384 = vmatmul.mubr.f32.gmra.mrb[0].mxu0 %v178
  %v385 = vpop.f32.mrb[0].mxu0
  %v386 = vadd.f32 0.0, %v385
  %v387 = vpop.f32.mrb[0].mxu0
  %388 = vmatprep.mubr.f32.mxu0 0.0
  %389 = vmatmul.mubr.f32.gmra.mrb[0].mxu0 %v181
  %v390 = vpop.f32.mrb[0].mxu0
  %v391 = vadd.f32 0.0, %v390
  %v392 = vpop.f32.mrb[0].mxu0
  %393 = vmatprep.mubr.f32.mxu0 0.0
  %394 = vmatmul.mubr.f32.gmra.mrb[0].mxu0 %v184
  %v395 = vpop.f32.mrb[0].mxu0
  %v396 = vadd.f32 0.0, %v395
  %v397 = vpop.f32.mrb[0].mxu0
  %398 = vmatprep.mubr.f32.mxu0 0.0
  %399 = vmatmul.mubr.f32.gmra.mrb[0].mxu0 %v187
  %v400 = vpop.f32.mrb[0].mxu0
  %v401 = vadd.f32 0.0, %v400
  %v402 = vpop.f32.mrb[0].mxu0
  %403 = vmatprep.mubr.f32.mxu0 0.0
  %404 = vmatmul.mubr.f32.gmra.mrb[0].mxu0 %v190
  %v405 = vpop.f32.mrb[0].mxu0
  %v406 = vadd.f32 0.0, %v405
  %v407 = vpop.f32.mrb[0].mxu0
  %408 = vmatprep.mubr.f32.mxu0 0.0
  %409 = vmatmul.mubr.f32.gmra.mrb[0].mxu0 %v193
  %v410 = vpop.f32.mrb[0].mxu0
  %v411 = vadd.f32 0.0, %v410
  %v412 = vpop.f32.mrb[0].mxu0
  %413 = vmatprep.mubr.f32.mxu0 0.0
  %414 = vmatmul.mubr.f32.gmra.mrb[0].mxu0 %v196
  %v415 = vpop.f32.mrb[0].mxu0
  %v416 = vadd.f32 0.0, %v415
  %v417 = vpop.f32.mrb[0].mxu0
  %418 = vmatprep.mubr.f32.mxu0 0.0
  %419 = vmatmul.mubr.f32.gmra.mrb[0].mxu0 %v199
  %v420 = vpop.f32.mrb[0].mxu0
  %v421 = vadd.f32 0.0, %v420
  %v422 = vpop.f32.mrb[0].mxu0
  %423 = vmatprep.mubr.f32.mxu0 0.0
  %424 = vmatmul.mubr.f32.gmra.mrb[0].mxu0 %v202
  %v425 = vpop.f32.mrb[0].mxu0
  %v426 = vadd.f32 0.0, %v425
  %v427 = vpop.f32.mrb[0].mxu0
  %428 = vmatprep.mubr.f32.mxu0 0.0
  %429 = vmatmul.mubr.f32.gmra.mrb[0].mxu0 %v205
  %v430 = vpop.f32.mrb[0].mxu0
  %v431 = vadd.f32 0.0, %v430
  %v432 = vpop.f32.mrb[0].mxu0
  %433 = vmatprep.mubr.f32.mxu0 0.0
  %434 = vmatmul.mubr.f32.gmra.mrb[0].mxu0 %v208
  %v435 = vpop.f32.mrb[0].mxu0
  %v436 = vadd.f32 0.0, %v435
  %v437 = vpop.f32.mrb[0].mxu0
  %438 = vdwg.mxu0
  %vm439 = vcmask 97280
  %v441 = vsel %vm439, %v49, 0
  %v444 = vsel %vm439, %v50, 0
  %v447 = vsel %vm439, %v51, 0
  %v450 = vsel %vm439, %v52, 0
  %v453 = vsel %vm439, %v53, 0
  %v456 = vsel %vm439, %v54, 0
  %v459 = vsel %vm439, %v55, 0
  %v462 = vsel %vm439, %v56, 0
  %v465 = vsel %vm439, %v57, 0
  %v468 = vsel %vm439, %v58, 0
  %v471 = vsel %vm439, %v59, 0
  %v474 = vsel %vm439, %v60, 0
  %v477 = vsel %vm439, %v61, 0
  %v480 = vsel %vm439, %v62, 0
  %v483 = vsel %vm439, %v63, 0
  %v486 = vsel %vm439, %v64, 0
  %v489 = vsel %vm439, %v65, 0
  %v492 = vsel %vm439, %v66, 0
  %v495 = vsel %vm439, %v67, 0
  %v498 = vsel %vm439, %v68, 0
  %v501 = vsel %vm439, %v69, 0
  %v504 = vsel %vm439, %v70, 0
  %v507 = vsel %vm439, %v71, 0
  %v510 = vsel %vm439, %v72, 0
  %v513 = vsel %vm439, %v73, 0
  %v516 = vsel %vm439, %v74, 0
  %v519 = vsel %vm439, %v75, 0
  %v522 = vsel %vm439, %v76, 0
  %v525 = vsel %vm439, %v77, 0
  %v528 = vsel %vm439, %v78, 0
  %v531 = vsel %vm439, %v79, 0
  %v534 = vsel %vm439, %v80, 0
  %v537 = vsel %vm210, %v35, 0
  %539 = vmatprep.subr.mxu0 0.0
  %540 = vmatpush1.msra.mxu0 %v34
  %541 = vmatprep.subr.mxu0 0.0
  %542 = vmatpush1.msra.mxu0 %v537
  %543 = vmatprep.subr.mxu0 0.0
  %544 = vmatpush1.msra.mxu0 0.0
  %545 = vmatprep.subr.mxu0 0.0
  %546 = vmatpush1.msra.mxu0 0.0
  %547 = vmatprep.subr.mxu0 0.0
  %548 = vmatpush1.msra.mxu0 0.0
  %549 = vmatprep.subr.mxu0 0.0
  %550 = vmatpush1.msra.mxu0 0.0
  %551 = vmatprep.subr.mxu0 0.0
  %552 = vmatpush1.msra.mxu0 0.0
  %553 = vmatprep.subr.mxu0 0.0
  %554 = vmatpush1.msra.mxu0 0.0
  %555 = vmatprep.subr.mxu0 0.0
  %556 = vmatpush1.msra.mxu0 0.0
  %557 = vmatprep.subr.mxu0 0.0
  %558 = vmatpush1.msra.mxu0 0.0
  %559 = vmatprep.subr.mxu0 0.0
  %560 = vmatpush1.msra.mxu0 0.0
  %561 = vmatprep.subr.mxu0 0.0
  %562 = vmatpush1.msra.mxu0 0.0
  %563 = vmatprep.subr.mxu0 0.0
  %564 = vmatpush1.msra.mxu0 0.0
  %565 = vmatprep.subr.mxu0 0.0
  %566 = vmatpush1.msra.mxu0 0.0
  %567 = vmatprep.subr.mxu0 0.0
  %568 = vmatpush1.msra.mxu0 0.0
  %569 = vmatprep.subr.mxu0 0.0
  %570 = vmatpush1.msra.mxu0 0.0
  %571 = vmatprep.subr.mxu0 0.0
  %572 = vmatpush1.msra.mxu0 0.0
  %573 = vmatprep.subr.mxu0 0.0
  %574 = vmatpush1.msra.mxu0 0.0
  %575 = vmatprep.subr.mxu0 0.0
  %576 = vmatpush1.msra.mxu0 0.0
  %577 = vmatprep.subr.mxu0 0.0
  %578 = vmatpush1.msra.mxu0 0.0
  %579 = vmatprep.subr.mxu0 0.0
  %580 = vmatpush1.msra.mxu0 0.0
  %581 = vmatprep.subr.mxu0 0.0
  %582 = vmatpush1.msra.mxu0 0.0
  %583 = vmatprep.subr.mxu0 0.0
  %584 = vmatpush1.msra.mxu0 0.0
  %585 = vmatprep.subr.mxu0 0.0
  %586 = vmatpush1.msra.mxu0 0.0
  %587 = vmatprep.subr.mxu0 0.0
  %588 = vmatpush1.msra.mxu0 0.0
  %589 = vmatprep.subr.mxu0 0.0
  %590 = vmatpush1.msra.mxu0 0.0
  %591 = vmatprep.subr.mxu0 0.0
  %592 = vmatpush1.msra.mxu0 0.0
  %593 = vmatprep.subr.mxu0 0.0
  %594 = vmatpush1.msra.mxu0 0.0
  %595 = vmatprep.subr.mxu0 0.0
  %596 = vmatpush1.msra.mxu0 0.0
  %597 = vmatprep.subr.mxu0 0.0
  %598 = vmatpush1.msra.mxu0 0.0
  %599 = vmatprep.subr.mxu0 0.0
  %600 = vmatpush1.msra.mxu0 0.0
  %601 = vmatprep.subr.mxu0 0.0
  %602 = vmatpush1.msra.mxu0 0.0
  %603 = vmatprep.mubr.f32.mxu0 0.0
  %604 = vmatmul.mubr.f32.gmra.mrb[0].mxu0 %v441
  %v605 = vpop.f32.mrb[0].mxu0
  %v606 = vadd.f32 %v281, %v605
  %v607 = vpop.f32.mrb[0].mxu0
  %608 = vmatprep.mubr.f32.mxu0 0.0
  %609 = vmatmul.mubr.f32.gmra.mrb[0].mxu0 %v444
  %v610 = vpop.f32.mrb[0].mxu0
  %v611 = vadd.f32 %v286, %v610
  %v612 = vpop.f32.mrb[0].mxu0
  %613 = vmatprep.mubr.f32.mxu0 0.0
  %614 = vmatmul.mubr.f32.gmra.mrb[0].mxu0 %v447
  %v615 = vpop.f32.mrb[0].mxu0
  %v616 = vadd.f32 %v291, %v615
  %v617 = vpop.f32.mrb[0].mxu0
  %618 = vmatprep.mubr.f32.mxu0 0.0
  %619 = vmatmul.mubr.f32.gmra.mrb[0].mxu0 %v450
  %v620 = vpop.f32.mrb[0].mxu0
  %v621 = vadd.f32 %v296, %v620
  %v622 = vpop.f32.mrb[0].mxu0
  %623 = vmatprep.mubr.f32.mxu0 0.0
  %624 = vmatmul.mubr.f32.gmra.mrb[0].mxu0 %v453
  %v625 = vpop.f32.mrb[0].mxu0
  %v626 = vadd.f32 %v301, %v625
  %v627 = vpop.f32.mrb[0].mxu0
  %628 = vmatprep.mubr.f32.mxu0 0.0
  %629 = vmatmul.mubr.f32.gmra.mrb[0].mxu0 %v456
  %v630 = vpop.f32.mrb[0].mxu0
  %v631 = vadd.f32 %v306, %v630
  %v632 = vpop.f32.mrb[0].mxu0
  %633 = vmatprep.mubr.f32.mxu0 0.0
  %634 = vmatmul.mubr.f32.gmra.mrb[0].mxu0 %v459
  %v635 = vpop.f32.mrb[0].mxu0
  %v636 = vadd.f32 %v311, %v635
  %v637 = vpop.f32.mrb[0].mxu0
  %638 = vmatprep.mubr.f32.mxu0 0.0
  %639 = vmatmul.mubr.f32.gmra.mrb[0].mxu0 %v462
  %v640 = vpop.f32.mrb[0].mxu0
  %v641 = vadd.f32 %v316, %v640
  %v642 = vpop.f32.mrb[0].mxu0
  %643 = vmatprep.mubr.f32.mxu0 0.0
  %644 = vmatmul.mubr.f32.gmra.mrb[0].mxu0 %v465
  %v645 = vpop.f32.mrb[0].mxu0
  %v646 = vadd.f32 %v321, %v645
  %v647 = vpop.f32.mrb[0].mxu0
  %648 = vmatprep.mubr.f32.mxu0 0.0
  %649 = vmatmul.mubr.f32.gmra.mrb[0].mxu0 %v468
  %v650 = vpop.f32.mrb[0].mxu0
  %v651 = vadd.f32 %v326, %v650
  %v652 = vpop.f32.mrb[0].mxu0
  %653 = vmatprep.mubr.f32.mxu0 0.0
  %654 = vmatmul.mubr.f32.gmra.mrb[0].mxu0 %v471
  %v655 = vpop.f32.mrb[0].mxu0
  %v656 = vadd.f32 %v331, %v655
  %v657 = vpop.f32.mrb[0].mxu0
  %658 = vmatprep.mubr.f32.mxu0 0.0
  %659 = vmatmul.mubr.f32.gmra.mrb[0].mxu0 %v474
  %v660 = vpop.f32.mrb[0].mxu0
  %v661 = vadd.f32 %v336, %v660
  %v662 = vpop.f32.mrb[0].mxu0
  %663 = vmatprep.mubr.f32.mxu0 0.0
  %664 = vmatmul.mubr.f32.gmra.mrb[0].mxu0 %v477
  %v665 = vpop.f32.mrb[0].mxu0
  %v666 = vadd.f32 %v341, %v665
  %v667 = vpop.f32.mrb[0].mxu0
  %668 = vmatprep.mubr.f32.mxu0 0.0
  %669 = vmatmul.mubr.f32.gmra.mrb[0].mxu0 %v480
  %v670 = vpop.f32.mrb[0].mxu0
  %v671 = vadd.f32 %v346, %v670
  %v672 = vpop.f32.mrb[0].mxu0
  %673 = vmatprep.mubr.f32.mxu0 0.0
  %674 = vmatmul.mubr.f32.gmra.mrb[0].mxu0 %v483
  %v675 = vpop.f32.mrb[0].mxu0
  %v676 = vadd.f32 %v351, %v675
  %v677 = vpop.f32.mrb[0].mxu0
  %678 = vmatprep.mubr.f32.mxu0 0.0
  %679 = vmatmul.mubr.f32.gmra.mrb[0].mxu0 %v486
  %v680 = vpop.f32.mrb[0].mxu0
  %v681 = vadd.f32 %v356, %v680
  %v682 = vpop.f32.mrb[0].mxu0
  %683 = vmatprep.mubr.f32.mxu0 0.0
  %684 = vmatmul.mubr.f32.gmra.mrb[0].mxu0 %v489
  %v685 = vpop.f32.mrb[0].mxu0
  %v686 = vadd.f32 %v361, %v685
  %v687 = vpop.f32.mrb[0].mxu0
  %688 = vmatprep.mubr.f32.mxu0 0.0
  %689 = vmatmul.mubr.f32.gmra.mrb[0].mxu0 %v492
  %v690 = vpop.f32.mrb[0].mxu0
  %v691 = vadd.f32 %v366, %v690
  %v692 = vpop.f32.mrb[0].mxu0
  %693 = vmatprep.mubr.f32.mxu0 0.0
  %694 = vmatmul.mubr.f32.gmra.mrb[0].mxu0 %v495
  %v695 = vpop.f32.mrb[0].mxu0
  %v696 = vadd.f32 %v371, %v695
  %v697 = vpop.f32.mrb[0].mxu0
  %698 = vmatprep.mubr.f32.mxu0 0.0
  %699 = vmatmul.mubr.f32.gmra.mrb[0].mxu0 %v498
  %v700 = vpop.f32.mrb[0].mxu0
  %v701 = vadd.f32 %v376, %v700
  %v702 = vpop.f32.mrb[0].mxu0
  %703 = vmatprep.mubr.f32.mxu0 0.0
  %704 = vmatmul.mubr.f32.gmra.mrb[0].mxu0 %v501
  %v705 = vpop.f32.mrb[0].mxu0
  %v706 = vadd.f32 %v381, %v705
  %v707 = vpop.f32.mrb[0].mxu0
  %708 = vmatprep.mubr.f32.mxu0 0.0
  %709 = vmatmul.mubr.f32.gmra.mrb[0].mxu0 %v504
  %v710 = vpop.f32.mrb[0].mxu0
  %v711 = vadd.f32 %v386, %v710
  %v712 = vpop.f32.mrb[0].mxu0
  %713 = vmatprep.mubr.f32.mxu0 0.0
  %714 = vmatmul.mubr.f32.gmra.mrb[0].mxu0 %v507
  %v715 = vpop.f32.mrb[0].mxu0
  %v716 = vadd.f32 %v391, %v715
  %v717 = vpop.f32.mrb[0].mxu0
  %718 = vmatprep.mubr.f32.mxu0 0.0
  %719 = vmatmul.mubr.f32.gmra.mrb[0].mxu0 %v510
  %v720 = vpop.f32.mrb[0].mxu0
  %v721 = vadd.f32 %v396, %v720
  %v722 = vpop.f32.mrb[0].mxu0
  %723 = vmatprep.mubr.f32.mxu0 0.0
  %724 = vmatmul.mubr.f32.gmra.mrb[0].mxu0 %v513
  %v725 = vpop.f32.mrb[0].mxu0
  %v726 = vadd.f32 %v401, %v725
  %v727 = vpop.f32.mrb[0].mxu0
  %728 = vmatprep.mubr.f32.mxu0 0.0
  %729 = vmatmul.mubr.f32.gmra.mrb[0].mxu0 %v516
  %v730 = vpop.f32.mrb[0].mxu0
  %v731 = vadd.f32 %v406, %v730
  %v732 = vpop.f32.mrb[0].mxu0
  %733 = vmatprep.mubr.f32.mxu0 0.0
  %734 = vmatmul.mubr.f32.gmra.mrb[0].mxu0 %v519
  %v735 = vpop.f32.mrb[0].mxu0
  %v736 = vadd.f32 %v411, %v735
  %v737 = vpop.f32.mrb[0].mxu0
  %738 = vmatprep.mubr.f32.mxu0 0.0
  %739 = vmatmul.mubr.f32.gmra.mrb[0].mxu0 %v522
  %v740 = vpop.f32.mrb[0].mxu0
  %v741 = vadd.f32 %v416, %v740
  %v742 = vpop.f32.mrb[0].mxu0
  %743 = vmatprep.mubr.f32.mxu0 0.0
  %744 = vmatmul.mubr.f32.gmra.mrb[0].mxu0 %v525
  %v745 = vpop.f32.mrb[0].mxu0
  %v746 = vadd.f32 %v421, %v745
  %v747 = vpop.f32.mrb[0].mxu0
  %748 = vmatprep.mubr.f32.mxu0 0.0
  %749 = vmatmul.mubr.f32.gmra.mrb[0].mxu0 %v528
  %v750 = vpop.f32.mrb[0].mxu0
  %v751 = vadd.f32 %v426, %v750
  %v752 = vpop.f32.mrb[0].mxu0
  %753 = vmatprep.mubr.f32.mxu0 0.0
  %754 = vmatmul.mubr.f32.gmra.mrb[0].mxu0 %v531
  %v755 = vpop.f32.mrb[0].mxu0
  %v756 = vadd.f32 %v431, %v755
  %v757 = vpop.f32.mrb[0].mxu0
  %758 = vmatprep.mubr.f32.mxu0 0.0
  %759 = vmatmul.mubr.f32.gmra.mrb[0].mxu0 %v534
  %v760 = vpop.f32.mrb[0].mxu0
  %v761 = vadd.f32 %v436, %v760
  %v762 = vpop.f32.mrb[0].mxu0
  %763 = vdwg.mxu0
  %v765 = vlaneseq
  %v766 = vshrl.u32 %v765, 7
  %v767 = vsub.s32 0, %v766
  %v768 = vrot.slane %v37, %v767
  %v770 = vadd.f32 %v606, %v768
  %v771 = vadd.f32 %v611, %v768
  %v772 = vadd.f32 %v616, %v768
  %v773 = vadd.f32 %v621, %v768
  %v774 = vadd.f32 %v626, %v768
  %v775 = vadd.f32 %v631, %v768
  %v776 = vadd.f32 %v636, %v768
  %v777 = vadd.f32 %v641, %v768
  %v778 = vadd.f32 %v646, %v768
  %v779 = vadd.f32 %v651, %v768
  %v780 = vadd.f32 %v656, %v768
  %v781 = vadd.f32 %v661, %v768
  %v782 = vadd.f32 %v666, %v768
  %v783 = vadd.f32 %v671, %v768
  %v784 = vadd.f32 %v676, %v768
  %v785 = vadd.f32 %v681, %v768
  %v786 = vadd.f32 %v686, %v768
  %v787 = vadd.f32 %v691, %v768
  %v788 = vadd.f32 %v696, %v768
  %v789 = vadd.f32 %v701, %v768
  %v790 = vadd.f32 %v706, %v768
  %v791 = vadd.f32 %v711, %v768
  %v792 = vadd.f32 %v716, %v768
  %v793 = vadd.f32 %v721, %v768
  %v794 = vadd.f32 %v726, %v768
  %v795 = vadd.f32 %v731, %v768
  %v796 = vadd.f32 %v736, %v768
  %v797 = vadd.f32 %v741, %v768
  %v798 = vadd.f32 %v746, %v768
  %v799 = vadd.f32 %v751, %v768
  %v800 = vadd.f32 %v756, %v768
  %v801 = vadd.f32 %v761, %v768
  %v802 = vmax.f32 %v770, 0.0
  %v803 = vmax.f32 %v771, 0.0
  %v804 = vmax.f32 %v772, 0.0
  %v805 = vmax.f32 %v773, 0.0
  %v806 = vmax.f32 %v774, 0.0
  %v807 = vmax.f32 %v775, 0.0
  %v808 = vmax.f32 %v776, 0.0
  %v809 = vmax.f32 %v777, 0.0
  %v810 = vmax.f32 %v778, 0.0
  %v811 = vmax.f32 %v779, 0.0
  %v812 = vmax.f32 %v780, 0.0
  %v813 = vmax.f32 %v781, 0.0
  %v814 = vmax.f32 %v782, 0.0
  %v815 = vmax.f32 %v783, 0.0
  %v816 = vmax.f32 %v784, 0.0
  %v817 = vmax.f32 %v785, 0.0
  %v818 = vmax.f32 %v786, 0.0
  %v819 = vmax.f32 %v787, 0.0
  %v820 = vmax.f32 %v788, 0.0
  %v821 = vmax.f32 %v789, 0.0
  %v822 = vmax.f32 %v790, 0.0
  %v823 = vmax.f32 %v791, 0.0
  %v824 = vmax.f32 %v792, 0.0
  %v825 = vmax.f32 %v793, 0.0
  %v826 = vmax.f32 %v794, 0.0
  %v827 = vmax.f32 %v795, 0.0
  %v828 = vmax.f32 %v796, 0.0
  %v829 = vmax.f32 %v797, 0.0
  %v830 = vmax.f32 %v798, 0.0
  %v831 = vmax.f32 %v799, 0.0
  %v832 = vmax.f32 %v800, 0.0
  %v833 = vmax.f32 %v801, 0.0
  %v835 = vlaneseq
  %v836 = vshrl.u32 %v835, 7
  %v837 = vsub.s32 0, %v836
  %v838 = vrot.slane %v46, %v837
  %vm840 = vcmask 523264
  %v842 = vsel %vm840, %v802, 0
  %v845 = vsel %vm840, %v803, 0
  %v848 = vsel %vm840, %v804, 0
  %v851 = vsel %vm840, %v805, 0
  %v854 = vsel %vm840, %v806, 0
  %v857 = vsel %vm840, %v807, 0
  %v860 = vsel %vm840, %v808, 0
  %v863 = vsel %vm840, %v809, 0
  %v866 = vsel %vm840, %v810, 0
  %v869 = vsel %vm840, %v811, 0
  %v872 = vsel %vm840, %v812, 0
  %v875 = vsel %vm840, %v813, 0
  %v878 = vsel %vm840, %v814, 0
  %v881 = vsel %vm840, %v815, 0
  %v884 = vsel %vm840, %v816, 0
  %v887 = vsel %vm840, %v817, 0
  %v890 = vsel %vm840, %v818, 0
  %v893 = vsel %vm840, %v819, 0
  %v896 = vsel %vm840, %v820, 0
  %v899 = vsel %vm840, %v821, 0
  %v902 = vsel %vm840, %v822, 0
  %v905 = vsel %vm840, %v823, 0
  %v908 = vsel %vm840, %v824, 0
  %v911 = vsel %vm840, %v825, 0
  %v914 = vsel %vm840, %v826, 0
  %v917 = vsel %vm840, %v827, 0
  %v920 = vsel %vm840, %v828, 0
  %v923 = vsel %vm840, %v829, 0
  %v926 = vsel %vm840, %v830, 0
  %v929 = vsel %vm840, %v831, 0
  %v932 = vsel %vm840, %v832, 0
  %v935 = vsel %vm840, %v833, 0
  %937 = vmatprep.subr.mxu0 0.0
  %938 = vmatpush1.msra.mxu0 %v38
  %939 = vmatprep.subr.mxu0 0.0
  %940 = vmatpush1.msra.mxu0 %v39
  %941 = vmatprep.subr.mxu0 0.0
  %942 = vmatpush1.msra.mxu0 %v40
  %943 = vmatprep.subr.mxu0 0.0
  %944 = vmatpush1.msra.mxu0 %v41
  %945 = vmatprep.subr.mxu0 0.0
  %946 = vmatpush1.msra.mxu0 %v42
  %947 = vmatprep.subr.mxu0 0.0
  %948 = vmatpush1.msra.mxu0 %v43
  %949 = vmatprep.subr.mxu0 0.0
  %950 = vmatpush1.msra.mxu0 %v44
  %951 = vmatprep.subr.mxu0 0.0
  %952 = vmatpush1.msra.mxu0 %v45
  %953 = vmatprep.subr.mxu0 0.0
  %954 = vmatpush1.msra.mxu0 0.0
  %955 = vmatprep.subr.mxu0 0.0
  %956 = vmatpush1.msra.mxu0 0.0
  %957 = vmatprep.subr.mxu0 0.0
  %958 = vmatpush1.msra.mxu0 0.0
  %959 = vmatprep.subr.mxu0 0.0
  %960 = vmatpush1.msra.mxu0 0.0
  %961 = vmatprep.subr.mxu0 0.0
  %962 = vmatpush1.msra.mxu0 0.0
  %963 = vmatprep.subr.mxu0 0.0
  %964 = vmatpush1.msra.mxu0 0.0
  %965 = vmatprep.subr.mxu0 0.0
  %966 = vmatpush1.msra.mxu0 0.0
  %967 = vmatprep.subr.mxu0 0.0
  %968 = vmatpush1.msra.mxu0 0.0
  %969 = vmatprep.subr.mxu0 0.0
  %970 = vmatpush1.msra.mxu0 0.0
  %971 = vmatprep.subr.mxu0 0.0
  %972 = vmatpush1.msra.mxu0 0.0
  %973 = vmatprep.subr.mxu0 0.0
  %974 = vmatpush1.msra.mxu0 0.0
  %975 = vmatprep.subr.mxu0 0.0
  %976 = vmatpush1.msra.mxu0 0.0
  %977 = vmatprep.subr.mxu0 0.0
  %978 = vmatpush1.msra.mxu0 0.0
  %979 = vmatprep.subr.mxu0 0.0
  %980 = vmatpush1.msra.mxu0 0.0
  %981 = vmatprep.subr.mxu0 0.0
  %982 = vmatpush1.msra.mxu0 0.0
  %983 = vmatprep.subr.mxu0 0.0
  %984 = vmatpush1.msra.mxu0 0.0
  %985 = vmatprep.subr.mxu0 0.0
  %986 = vmatpush1.msra.mxu0 0.0
  %987 = vmatprep.subr.mxu0 0.0
  %988 = vmatpush1.msra.mxu0 0.0
  %989 = vmatprep.subr.mxu0 0.0
  %990 = vmatpush1.msra.mxu0 0.0
  %991 = vmatprep.subr.mxu0 0.0
  %992 = vmatpush1.msra.mxu0 0.0
  %993 = vmatprep.subr.mxu0 0.0
  %994 = vmatpush1.msra.mxu0 0.0
  %995 = vmatprep.subr.mxu0 0.0
  %996 = vmatpush1.msra.mxu0 0.0
  %997 = vmatprep.subr.mxu0 0.0
  %998 = vmatpush1.msra.mxu0 0.0
  %999 = vmatprep.subr.mxu0 0.0
  %1000 = vmatpush1.msra.mxu0 0.0
  %1001 = vmatprep.mubr.f32.mxu0 0.0
  %1002 = vmatmul.mubr.f32.gmra.mrb[0].mxu0 %v842
  %v1003 = vpop.f32.mrb[0].mxu0
  %v1004 = vadd.f32 %v838, %v1003
  %v1005 = vpop.f32.mrb[0].mxu0
  %1006 = vmatprep.mubr.f32.mxu0 0.0
  %1007 = vmatmul.mubr.f32.gmra.mrb[0].mxu0 %v845
  %v1008 = vpop.f32.mrb[0].mxu0
  %v1009 = vadd.f32 %v838, %v1008
  %v1010 = vpop.f32.mrb[0].mxu0
  %1011 = vmatprep.mubr.f32.mxu0 0.0
  %1012 = vmatmul.mubr.f32.gmra.mrb[0].mxu0 %v848
  %v1013 = vpop.f32.mrb[0].mxu0
  %v1014 = vadd.f32 %v838, %v1013
  %v1015 = vpop.f32.mrb[0].mxu0
  %1016 = vmatprep.mubr.f32.mxu0 0.0
  %1017 = vmatmul.mubr.f32.gmra.mrb[0].mxu0 %v851
  %v1018 = vpop.f32.mrb[0].mxu0
  %v1019 = vadd.f32 %v838, %v1018
  %v1020 = vpop.f32.mrb[0].mxu0
  %1021 = vmatprep.mubr.f32.mxu0 0.0
  %1022 = vmatmul.mubr.f32.gmra.mrb[0].mxu0 %v854
  %v1023 = vpop.f32.mrb[0].mxu0
  %v1024 = vadd.f32 %v838, %v1023
  %v1025 = vpop.f32.mrb[0].mxu0
  %1026 = vmatprep.mubr.f32.mxu0 0.0
  %1027 = vmatmul.mubr.f32.gmra.mrb[0].mxu0 %v857
  %v1028 = vpop.f32.mrb[0].mxu0
  %v1029 = vadd.f32 %v838, %v1028
  %v1030 = vpop.f32.mrb[0].mxu0
  %1031 = vmatprep.mubr.f32.mxu0 0.0
  %1032 = vmatmul.mubr.f32.gmra.mrb[0].mxu0 %v860
  %v1033 = vpop.f32.mrb[0].mxu0
  %v1034 = vadd.f32 %v838, %v1033
  %v1035 = vpop.f32.mrb[0].mxu0
  %1036 = vmatprep.mubr.f32.mxu0 0.0
  %1037 = vmatmul.mubr.f32.gmra.mrb[0].mxu0 %v863
  %v1038 = vpop.f32.mrb[0].mxu0
  %v1039 = vadd.f32 %v838, %v1038
  %v1040 = vpop.f32.mrb[0].mxu0
  %1041 = vmatprep.mubr.f32.mxu0 0.0
  %1042 = vmatmul.mubr.f32.gmra.mrb[0].mxu0 %v866
  %v1043 = vpop.f32.mrb[0].mxu0
  %v1044 = vadd.f32 %v838, %v1043
  %v1045 = vpop.f32.mrb[0].mxu0
  %1046 = vmatprep.mubr.f32.mxu0 0.0
  %1047 = vmatmul.mubr.f32.gmra.mrb[0].mxu0 %v869
  %v1048 = vpop.f32.mrb[0].mxu0
  %v1049 = vadd.f32 %v838, %v1048
  %v1050 = vpop.f32.mrb[0].mxu0
  %1051 = vmatprep.mubr.f32.mxu0 0.0
  %1052 = vmatmul.mubr.f32.gmra.mrb[0].mxu0 %v872
  %v1053 = vpop.f32.mrb[0].mxu0
  %v1054 = vadd.f32 %v838, %v1053
  %v1055 = vpop.f32.mrb[0].mxu0
  %1056 = vmatprep.mubr.f32.mxu0 0.0
  %1057 = vmatmul.mubr.f32.gmra.mrb[0].mxu0 %v875
  %v1058 = vpop.f32.mrb[0].mxu0
  %v1059 = vadd.f32 %v838, %v1058
  %v1060 = vpop.f32.mrb[0].mxu0
  %1061 = vmatprep.mubr.f32.mxu0 0.0
  %1062 = vmatmul.mubr.f32.gmra.mrb[0].mxu0 %v878
  %v1063 = vpop.f32.mrb[0].mxu0
  %v1064 = vadd.f32 %v838, %v1063
  %v1065 = vpop.f32.mrb[0].mxu0
  %1066 = vmatprep.mubr.f32.mxu0 0.0
  %1067 = vmatmul.mubr.f32.gmra.mrb[0].mxu0 %v881
  %v1068 = vpop.f32.mrb[0].mxu0
  %v1069 = vadd.f32 %v838, %v1068
  %v1070 = vpop.f32.mrb[0].mxu0
  %1071 = vmatprep.mubr.f32.mxu0 0.0
  %1072 = vmatmul.mubr.f32.gmra.mrb[0].mxu0 %v884
  %v1073 = vpop.f32.mrb[0].mxu0
  %v1074 = vadd.f32 %v838, %v1073
  %v1075 = vpop.f32.mrb[0].mxu0
  %1076 = vmatprep.mubr.f32.mxu0 0.0
  %1077 = vmatmul.mubr.f32.gmra.mrb[0].mxu0 %v887
  %v1078 = vpop.f32.mrb[0].mxu0
  %v1079 = vadd.f32 %v838, %v1078
  %v1080 = vpop.f32.mrb[0].mxu0
  %1081 = vmatprep.mubr.f32.mxu0 0.0
  %1082 = vmatmul.mubr.f32.gmra.mrb[0].mxu0 %v890
  %v1083 = vpop.f32.mrb[0].mxu0
  %v1084 = vadd.f32 %v838, %v1083
  %v1085 = vpop.f32.mrb[0].mxu0
  %1086 = vmatprep.mubr.f32.mxu0 0.0
  %1087 = vmatmul.mubr.f32.gmra.mrb[0].mxu0 %v893
  %v1088 = vpop.f32.mrb[0].mxu0
  %v1089 = vadd.f32 %v838, %v1088
  %v1090 = vpop.f32.mrb[0].mxu0
  %1091 = vmatprep.mubr.f32.mxu0 0.0
  %1092 = vmatmul.mubr.f32.gmra.mrb[0].mxu0 %v896
  %v1093 = vpop.f32.mrb[0].mxu0
  %v1094 = vadd.f32 %v838, %v1093
  %v1095 = vpop.f32.mrb[0].mxu0
  %1096 = vmatprep.mubr.f32.mxu0 0.0
  %1097 = vmatmul.mubr.f32.gmra.mrb[0].mxu0 %v899
  %v1098 = vpop.f32.mrb[0].mxu0
  %v1099 = vadd.f32 %v838, %v1098
  %v1100 = vpop.f32.mrb[0].mxu0
  %1101 = vmatprep.mubr.f32.mxu0 0.0
  %1102 = vmatmul.mubr.f32.gmra.mrb[0].mxu0 %v902
  %v1103 = vpop.f32.mrb[0].mxu0
  %v1104 = vadd.f32 %v838, %v1103
  %v1105 = vpop.f32.mrb[0].mxu0
  %1106 = vmatprep.mubr.f32.mxu0 0.0
  %1107 = vmatmul.mubr.f32.gmra.mrb[0].mxu0 %v905
  %v1108 = vpop.f32.mrb[0].mxu0
  %v1109 = vadd.f32 %v838, %v1108
  %v1110 = vpop.f32.mrb[0].mxu0
  %1111 = vmatprep.mubr.f32.mxu0 0.0
  %1112 = vmatmul.mubr.f32.gmra.mrb[0].mxu0 %v908
  %v1113 = vpop.f32.mrb[0].mxu0
  %v1114 = vadd.f32 %v838, %v1113
  %v1115 = vpop.f32.mrb[0].mxu0
  %1116 = vmatprep.mubr.f32.mxu0 0.0
  %1117 = vmatmul.mubr.f32.gmra.mrb[0].mxu0 %v911
  %v1118 = vpop.f32.mrb[0].mxu0
  %v1119 = vadd.f32 %v838, %v1118
  %v1120 = vpop.f32.mrb[0].mxu0
  %1121 = vmatprep.mubr.f32.mxu0 0.0
  %1122 = vmatmul.mubr.f32.gmra.mrb[0].mxu0 %v914
  %v1123 = vpop.f32.mrb[0].mxu0
  %v1124 = vadd.f32 %v838, %v1123
  %v1125 = vpop.f32.mrb[0].mxu0
  %1126 = vmatprep.mubr.f32.mxu0 0.0
  %1127 = vmatmul.mubr.f32.gmra.mrb[0].mxu0 %v917
  %v1128 = vpop.f32.mrb[0].mxu0
  %v1129 = vadd.f32 %v838, %v1128
  %v1130 = vpop.f32.mrb[0].mxu0
  %1131 = vmatprep.mubr.f32.mxu0 0.0
  %1132 = vmatmul.mubr.f32.gmra.mrb[0].mxu0 %v920
  %v1133 = vpop.f32.mrb[0].mxu0
  %v1134 = vadd.f32 %v838, %v1133
  %v1135 = vpop.f32.mrb[0].mxu0
  %1136 = vmatprep.mubr.f32.mxu0 0.0
  %1137 = vmatmul.mubr.f32.gmra.mrb[0].mxu0 %v923
  %v1138 = vpop.f32.mrb[0].mxu0
  %v1139 = vadd.f32 %v838, %v1138
  %v1140 = vpop.f32.mrb[0].mxu0
  %1141 = vmatprep.mubr.f32.mxu0 0.0
  %1142 = vmatmul.mubr.f32.gmra.mrb[0].mxu0 %v926
  %v1143 = vpop.f32.mrb[0].mxu0
  %v1144 = vadd.f32 %v838, %v1143
  %v1145 = vpop.f32.mrb[0].mxu0
  %1146 = vmatprep.mubr.f32.mxu0 0.0
  %1147 = vmatmul.mubr.f32.gmra.mrb[0].mxu0 %v929
  %v1148 = vpop.f32.mrb[0].mxu0
  %v1149 = vadd.f32 %v838, %v1148
  %v1150 = vpop.f32.mrb[0].mxu0
  %1151 = vmatprep.mubr.f32.mxu0 0.0
  %1152 = vmatmul.mubr.f32.gmra.mrb[0].mxu0 %v932
  %v1153 = vpop.f32.mrb[0].mxu0
  %v1154 = vadd.f32 %v838, %v1153
  %v1155 = vpop.f32.mrb[0].mxu0
  %1156 = vmatprep.mubr.f32.mxu0 0.0
  %1157 = vmatmul.mubr.f32.gmra.mrb[0].mxu0 %v935
  %v1158 = vpop.f32.mrb[0].mxu0
  %v1159 = vadd.f32 %v838, %v1158
  %v1160 = vpop.f32.mrb[0].mxu0
  %1161 = vdwg.mxu0
  %v1162 = vmax.f32 %v1004, 0.0
  %v1163 = vmax.f32 %v1009, 0.0
  %v1164 = vmax.f32 %v1014, 0.0
  %v1165 = vmax.f32 %v1019, 0.0
  %v1166 = vmax.f32 %v1024, 0.0
  %v1167 = vmax.f32 %v1029, 0.0
  %v1168 = vmax.f32 %v1034, 0.0
  %v1169 = vmax.f32 %v1039, 0.0
  %v1170 = vmax.f32 %v1044, 0.0
  %v1171 = vmax.f32 %v1049, 0.0
  %v1172 = vmax.f32 %v1054, 0.0
  %v1173 = vmax.f32 %v1059, 0.0
  %v1174 = vmax.f32 %v1064, 0.0
  %v1175 = vmax.f32 %v1069, 0.0
  %v1176 = vmax.f32 %v1074, 0.0
  %v1177 = vmax.f32 %v1079, 0.0
  %v1178 = vmax.f32 %v1084, 0.0
  %v1179 = vmax.f32 %v1089, 0.0
  %v1180 = vmax.f32 %v1094, 0.0
  %v1181 = vmax.f32 %v1099, 0.0
  %v1182 = vmax.f32 %v1104, 0.0
  %v1183 = vmax.f32 %v1109, 0.0
  %v1184 = vmax.f32 %v1114, 0.0
  %v1185 = vmax.f32 %v1119, 0.0
  %v1186 = vmax.f32 %v1124, 0.0
  %v1187 = vmax.f32 %v1129, 0.0
  %v1188 = vmax.f32 %v1134, 0.0
  %v1189 = vmax.f32 %v1139, 0.0
  %v1190 = vmax.f32 %v1144, 0.0
  %v1191 = vmax.f32 %v1149, 0.0
  %v1192 = vmax.f32 %v1154, 0.0
  %v1193 = vmax.f32 %v1159, 0.0
  %v1195 = vlaneseq
  %v1196 = vshrl.u32 %v1195, 7
  %v1197 = vsub.s32 0, %v1196
  %v1198 = vrot.slane %v47, %v1197
  %v1200 = vmul.f32 %v1162, %v1198
  %v1201 = vmul.f32 %v1163, %v1198
  %v1202 = vmul.f32 %v1164, %v1198
  %v1203 = vmul.f32 %v1165, %v1198
  %v1204 = vmul.f32 %v1166, %v1198
  %v1205 = vmul.f32 %v1167, %v1198
  %v1206 = vmul.f32 %v1168, %v1198
  %v1207 = vmul.f32 %v1169, %v1198
  %v1208 = vmul.f32 %v1170, %v1198
  %v1209 = vmul.f32 %v1171, %v1198
  %v1210 = vmul.f32 %v1172, %v1198
  %v1211 = vmul.f32 %v1173, %v1198
  %v1212 = vmul.f32 %v1174, %v1198
  %v1213 = vmul.f32 %v1175, %v1198
  %v1214 = vmul.f32 %v1176, %v1198
  %v1215 = vmul.f32 %v1177, %v1198
  %v1216 = vmul.f32 %v1178, %v1198
  %v1217 = vmul.f32 %v1179, %v1198
  %v1218 = vmul.f32 %v1180, %v1198
  %v1219 = vmul.f32 %v1181, %v1198
  %v1220 = vmul.f32 %v1182, %v1198
  %v1221 = vmul.f32 %v1183, %v1198
  %v1222 = vmul.f32 %v1184, %v1198
  %v1223 = vmul.f32 %v1185, %v1198
  %v1224 = vmul.f32 %v1186, %v1198
  %v1225 = vmul.f32 %v1187, %v1198
  %v1226 = vmul.f32 %v1188, %v1198
  %v1227 = vmul.f32 %v1189, %v1198
  %v1228 = vmul.f32 %v1190, %v1198
  %v1229 = vmul.f32 %v1191, %v1198
  %v1230 = vmul.f32 %v1192, %v1198
  %v1231 = vmul.f32 %v1193, %v1198
  %v1232 = vsel %vm840, %v1200, 0.0
  %1233 = vadd.xlane.f32.xlu0 %v1232
  %v1234 = vpop.xlane.xlu0 %1233
  %v1235 = vsel %vm840, %v1201, 0.0
  %1236 = vadd.xlane.f32.xlu0 %v1235
  %v1237 = vpop.xlane.xlu0 %1236
  %v1238 = vsel %vm840, %v1202, 0.0
  %1239 = vadd.xlane.f32.xlu0 %v1238
  %v1240 = vpop.xlane.xlu0 %1239
  %v1241 = vsel %vm840, %v1203, 0.0
  %1242 = vadd.xlane.f32.xlu0 %v1241
  %v1243 = vpop.xlane.xlu0 %1242
  %v1244 = vsel %vm840, %v1204, 0.0
  %1245 = vadd.xlane.f32.xlu0 %v1244
  %v1246 = vpop.xlane.xlu0 %1245
  %v1247 = vsel %vm840, %v1205, 0.0
  %1248 = vadd.xlane.f32.xlu0 %v1247
  %v1249 = vpop.xlane.xlu0 %1248
  %v1250 = vsel %vm840, %v1206, 0.0
  %1251 = vadd.xlane.f32.xlu0 %v1250
  %v1252 = vpop.xlane.xlu0 %1251
  %v1253 = vsel %vm840, %v1207, 0.0
  %1254 = vadd.xlane.f32.xlu0 %v1253
  %v1255 = vpop.xlane.xlu0 %1254
  %v1256 = vsel %vm840, %v1208, 0.0
  %1257 = vadd.xlane.f32.xlu0 %v1256
  %v1258 = vpop.xlane.xlu0 %1257
  %v1259 = vsel %vm840, %v1209, 0.0
  %1260 = vadd.xlane.f32.xlu0 %v1259
  %v1261 = vpop.xlane.xlu0 %1260
  %v1262 = vsel %vm840, %v1210, 0.0
  %1263 = vadd.xlane.f32.xlu0 %v1262
  %v1264 = vpop.xlane.xlu0 %1263
  %v1265 = vsel %vm840, %v1211, 0.0
  %1266 = vadd.xlane.f32.xlu0 %v1265
  %v1267 = vpop.xlane.xlu0 %1266
  %v1268 = vsel %vm840, %v1212, 0.0
  %1269 = vadd.xlane.f32.xlu0 %v1268
  %v1270 = vpop.xlane.xlu0 %1269
  %v1271 = vsel %vm840, %v1213, 0.0
  %1272 = vadd.xlane.f32.xlu0 %v1271
  %v1273 = vpop.xlane.xlu0 %1272
  %v1274 = vsel %vm840, %v1214, 0.0
  %1275 = vadd.xlane.f32.xlu0 %v1274
  %v1276 = vpop.xlane.xlu0 %1275
  %v1277 = vsel %vm840, %v1215, 0.0
  %1278 = vadd.xlane.f32.xlu0 %v1277
  %v1279 = vpop.xlane.xlu0 %1278
  %v1280 = vsel %vm840, %v1216, 0.0
  %1281 = vadd.xlane.f32.xlu0 %v1280
  %v1282 = vpop.xlane.xlu0 %1281
  %v1283 = vsel %vm840, %v1217, 0.0
  %1284 = vadd.xlane.f32.xlu0 %v1283
  %v1285 = vpop.xlane.xlu0 %1284
  %v1286 = vsel %vm840, %v1218, 0.0
  %1287 = vadd.xlane.f32.xlu0 %v1286
  %v1288 = vpop.xlane.xlu0 %1287
  %v1289 = vsel %vm840, %v1219, 0.0
  %1290 = vadd.xlane.f32.xlu0 %v1289
  %v1291 = vpop.xlane.xlu0 %1290
  %v1292 = vsel %vm840, %v1220, 0.0
  %1293 = vadd.xlane.f32.xlu0 %v1292
  %v1294 = vpop.xlane.xlu0 %1293
  %v1295 = vsel %vm840, %v1221, 0.0
  %1296 = vadd.xlane.f32.xlu0 %v1295
  %v1297 = vpop.xlane.xlu0 %1296
  %v1298 = vsel %vm840, %v1222, 0.0
  %1299 = vadd.xlane.f32.xlu0 %v1298
  %v1300 = vpop.xlane.xlu0 %1299
  %v1301 = vsel %vm840, %v1223, 0.0
  %1302 = vadd.xlane.f32.xlu0 %v1301
  %v1303 = vpop.xlane.xlu0 %1302
  %v1304 = vsel %vm840, %v1224, 0.0
  %1305 = vadd.xlane.f32.xlu0 %v1304
  %v1306 = vpop.xlane.xlu0 %1305
  %v1307 = vsel %vm840, %v1225, 0.0
  %1308 = vadd.xlane.f32.xlu0 %v1307
  %v1309 = vpop.xlane.xlu0 %1308
  %v1310 = vsel %vm840, %v1226, 0.0
  %1311 = vadd.xlane.f32.xlu0 %v1310
  %v1312 = vpop.xlane.xlu0 %1311
  %v1313 = vsel %vm840, %v1227, 0.0
  %1314 = vadd.xlane.f32.xlu0 %v1313
  %v1315 = vpop.xlane.xlu0 %1314
  %v1316 = vsel %vm840, %v1228, 0.0
  %1317 = vadd.xlane.f32.xlu0 %v1316
  %v1318 = vpop.xlane.xlu0 %1317
  %v1319 = vsel %vm840, %v1229, 0.0
  %1320 = vadd.xlane.f32.xlu0 %v1319
  %v1321 = vpop.xlane.xlu0 %1320
  %v1322 = vsel %vm840, %v1230, 0.0
  %1323 = vadd.xlane.f32.xlu0 %v1322
  %v1324 = vpop.xlane.xlu0 %1323
  %v1325 = vsel %vm840, %v1231, 0.0
  %1326 = vadd.xlane.f32.xlu0 %v1325
  %v1327 = vpop.xlane.xlu0 %1326
  %v1329 = vlaneseq
  %v1330 = vshrl.u32 %v1329, 7
  %v1331 = vsub.s32 0, %v1330
  %v1332 = vrot.slane %v48, %v1331
  %v1334 = vadd.f32 %v1234, %v1332
  %v1335 = vadd.f32 %v1237, %v1332
  %v1336 = vadd.f32 %v1240, %v1332
  %v1337 = vadd.f32 %v1243, %v1332
  %v1338 = vadd.f32 %v1246, %v1332
  %v1339 = vadd.f32 %v1249, %v1332
  %v1340 = vadd.f32 %v1252, %v1332
  %v1341 = vadd.f32 %v1255, %v1332
  %v1342 = vadd.f32 %v1258, %v1332
  %v1343 = vadd.f32 %v1261, %v1332
  %v1344 = vadd.f32 %v1264, %v1332
  %v1345 = vadd.f32 %v1267, %v1332
  %v1346 = vadd.f32 %v1270, %v1332
  %v1347 = vadd.f32 %v1273, %v1332
  %v1348 = vadd.f32 %v1276, %v1332
  %v1349 = vadd.f32 %v1279, %v1332
  %v1350 = vadd.f32 %v1282, %v1332
  %v1351 = vadd.f32 %v1285, %v1332
  %v1352 = vadd.f32 %v1288, %v1332
  %v1353 = vadd.f32 %v1291, %v1332
  %v1354 = vadd.f32 %v1294, %v1332
  %v1355 = vadd.f32 %v1297, %v1332
  %v1356 = vadd.f32 %v1300, %v1332
  %v1357 = vadd.f32 %v1303, %v1332
  %v1358 = vadd.f32 %v1306, %v1332
  %v1359 = vadd.f32 %v1309, %v1332
  %v1360 = vadd.f32 %v1312, %v1332
  %v1361 = vadd.f32 %v1315, %v1332
  %v1362 = vadd.f32 %v1318, %v1332
  %v1363 = vadd.f32 %v1321, %v1332
  %v1364 = vadd.f32 %v1324, %v1332
  %v1365 = vadd.f32 %v1327, %v1332
  %vm1366 = vcmask 7168
  %1367 = vst.msk [vmem:[%s9] sm:$0xff] %vm1366, %v1334
  %1368 = vst.msk [vmem:[%s9 + $0x8] sm:$0xff] %vm1366, %v1335
  %1369 = vst.msk [vmem:[%s9 + $0x10] sm:$0xff] %vm1366, %v1336
  %1370 = vst.msk [vmem:[%s9 + $0x18] sm:$0xff] %vm1366, %v1337
  %1371 = vst.msk [vmem:[%s9 + $0x20] sm:$0xff] %vm1366, %v1338
  %1372 = vst.msk [vmem:[%s9 + $0x28] sm:$0xff] %vm1366, %v1339
  %1373 = vst.msk [vmem:[%s9 + $0x30] sm:$0xff] %vm1366, %v1340
  %1374 = vst.msk [vmem:[%s9 + $0x38] sm:$0xff] %vm1366, %v1341
  %1375 = vst.msk [vmem:[%s9 + $0x40] sm:$0xff] %vm1366, %v1342
  %1376 = vst.msk [vmem:[%s9 + $0x48] sm:$0xff] %vm1366, %v1343
  %1377 = vst.msk [vmem:[%s9 + $0x50] sm:$0xff] %vm1366, %v1344
  %1378 = vst.msk [vmem:[%s9 + $0x58] sm:$0xff] %vm1366, %v1345
  %1379 = vst.msk [vmem:[%s9 + $0x60] sm:$0xff] %vm1366, %v1346
  %1380 = vst.msk [vmem:[%s9 + $0x68] sm:$0xff] %vm1366, %v1347
  %1381 = vst.msk [vmem:[%s9 + $0x70] sm:$0xff] %vm1366, %v1348
  %1382 = vst.msk [vmem:[%s9 + $0x78] sm:$0xff] %vm1366, %v1349
  %1383 = vst.msk [vmem:[%s9 + $0x80] sm:$0xff] %vm1366, %v1350
  %1384 = vst.msk [vmem:[%s9 + $0x88] sm:$0xff] %vm1366, %v1351
  %1385 = vst.msk [vmem:[%s9 + $0x90] sm:$0xff] %vm1366, %v1352
  %1386 = vst.msk [vmem:[%s9 + $0x98] sm:$0xff] %vm1366, %v1353
  %1387 = vst.msk [vmem:[%s9 + $0xa0] sm:$0xff] %vm1366, %v1354
  %1388 = vst.msk [vmem:[%s9 + $0xa8] sm:$0xff] %vm1366, %v1355
  %1389 = vst.msk [vmem:[%s9 + $0xb0] sm:$0xff] %vm1366, %v1356
  %1390 = vst.msk [vmem:[%s9 + $0xb8] sm:$0xff] %vm1366, %v1357
  %1391 = vst.msk [vmem:[%s9 + $0xc0] sm:$0xff] %vm1366, %v1358
  %1392 = vst.msk [vmem:[%s9 + $0xc8] sm:$0xff] %vm1366, %v1359
  %1393 = vst.msk [vmem:[%s9 + $0xd0] sm:$0xff] %vm1366, %v1360
  %1394 = vst.msk [vmem:[%s9 + $0xd8] sm:$0xff] %vm1366, %v1361
  %1395 = vst.msk [vmem:[%s9 + $0xe0] sm:$0xff] %vm1366, %v1362
  %1396 = vst.msk [vmem:[%s9 + $0xe8] sm:$0xff] %vm1366, %v1363
  %1397 = vst.msk [vmem:[%s9 + $0xf0] sm:$0xff] %vm1366, %v1364
  %1398 = vst.msk [vmem:[%s9 + $0xf8] sm:$0xff] %vm1366, %v1365
  // Predicated region
  $region38: #{tpu_custom_call.1} parent=0 // pred_check
    _
  $region39: #{tpu_custom_call.1} parent=0 // pred_check_branch
    %1400 = sbr.rel (0) target = $region41
  $region40: #{tpu_custom_call.1} parent=0 // pred_region
    _
  $region41: #{tpu_custom_call.1} parent=0 // pred_fallthru
    _
  // Predicated region
  $region42: #{tpu_custom_call.1} parent=0 // pred_check
    _
  $region43: #{tpu_custom_call.1} parent=0 // pred_check_branch
    %1402 = sbr.rel (0) target = $region45
  $region44: #{tpu_custom_call.1} parent=0 // pred_region
    _
  $region45: #{tpu_custom_call.1} parent=0 // pred_fallthru
    _

</llo_original>
